<compile_context>
chip_gen: v7x
topology: tpu7x:2x2x1
jax: 0.10.0
libtpu: 0.0.40
codegen_flags: <defaults>
</compile_context>

<pallas_src>
import jax
import jax.numpy as jnp
from jax.experimental import pallas as pl
from jax.experimental.pallas import tpu as pltpu


def _discriminator_kernel(hpl_ref, hmi_ref, v_ref, eb_ref, out_ref):
    # hpl/hmi: (TILE_N, n_h)  streamed node embeddings
    # v_ref:   (1, n_h)       bilinear vector v = c @ W^T (resident; index_map -> (0, 0))
    # eb_ref:  (TILE_N, 2)    fused bias plane (bilinear bias + optional s_bias1/s_bias2)
    # out_ref: (TILE_N, 2)    logits tile
    v = v_ref[...].astype(jnp.float32)                 # broadcasts over rows (sublanes)
    hpl = hpl_ref[...].astype(jnp.float32)
    hmi = hmi_ref[...].astype(jnp.float32)
    sc1 = jnp.sum(hpl * v, axis=-1, keepdims=True)     # (TILE_N, 1), exact f32 accumulation
    sc2 = jnp.sum(hmi * v, axis=-1, keepdims=True)     # (TILE_N, 1)
    out_ref[...] = (jnp.concatenate([sc1, sc2], axis=1) + eb_ref[...]).astype(out_ref.dtype)


def _round_up(x, m):
    return ((x + m - 1) // m) * m


def _pick_tile_rows(n_rows, n_h, itemsize):
    # ~2 MiB per streamed (tile_n, n_h) buffer: 2 inputs x 2 pipeline buffers ~= 8 MiB VMEM,
    # comfortably inside the smallest default scoped VMEM limit across v5e/v6e/v7x.
    cap = max(8, (2 * 1024 * 1024) // max(1, n_h * itemsize))
    t = min(512, cap, _round_up(n_rows, 8))
    return max(8, (t // 8) * 8)


def discriminator_forward(c, h_pl, h_mi, W, bias, s_bias1=None, s_bias2=None):
    """Matches Discriminator.forward: logits = cat([f_k(h_pl, c_x), f_k(h_mi, c_x)], 1)."""
    N, n_h = h_pl.shape
    itemsize = jnp.dtype(h_pl.dtype).itemsize

    # v = c @ W^T computed once in plain JAX (the broadcast bilinear collapses to a
    # per-row dot with v); contraction expressed directly, no materialized W.T.
    c2 = jnp.asarray(c, jnp.float32).reshape(1, n_h)
    v = jax.lax.dot_general(c2, jnp.asarray(W, jnp.float32),
                            (((1,), (1,)), ((), ())),
                            preferred_element_type=jnp.float32)        # (1, n_h)

    # Fused additive-bias plane: column 0 -> sc_1, column 1 -> sc_2.
    def _row_bias(sb):
        if sb is None:
            return jnp.zeros((N,), jnp.float32)
        return jnp.broadcast_to(jnp.asarray(sb, jnp.float32).reshape(-1), (N,))

    bias0 = jnp.asarray(bias, jnp.float32).reshape(-1)[0]
    eb = jnp.stack([_row_bias(s_bias1), _row_bias(s_bias2)], axis=1) + bias0   # (N, 2)

    tile_n = _pick_tile_rows(N, n_h, itemsize)
    grid = (pl.cdiv(N, tile_n),)

    cost = pl.CostEstimate(
        flops=4 * N * n_h,
        transcendentals=0,
        bytes_accessed=2 * N * n_h * itemsize + n_h * 4 + 2 * (N * 2 * 4),
    )

    return pl.pallas_call(
        _discriminator_kernel,
        out_shape=jax.ShapeDtypeStruct((N, 2), jnp.float32),
        grid=grid,
        in_specs=[
            pl.BlockSpec((tile_n, n_h), lambda i: (i, 0)),   # h_pl (streamed over N)
            pl.BlockSpec((tile_n, n_h), lambda i: (i, 0)),   # h_mi (streamed over N)
            pl.BlockSpec((1, n_h), lambda i: (0, 0)),        # v (same tiny block every step)
            pl.BlockSpec((tile_n, 2), lambda i: (i, 0)),     # fused bias plane
        ],
        out_specs=pl.BlockSpec((tile_n, 2), lambda i: (i, 0)),
        compiler_params=pltpu.CompilerParams(
            dimension_semantics=("parallel",)),              # 2 TCs on v7x; free elsewhere
        cost_estimate=cost,
    )(h_pl, h_mi, v, eb)


def init_discriminator_params(key, n_h):
    """Deterministic xavier_uniform_ init for nn.Bilinear(n_h, n_h, 1); bias = 0."""
    fan_in = n_h * n_h     # PyTorch fan computation for the (1, n_h, n_h) bilinear weight
    fan_out = 1 * n_h
    bound = (6.0 / (fan_in + fan_out)) ** 0.5
    W = jax.random.uniform(key, (n_h, n_h), dtype=jnp.float32, minval=-bound, maxval=bound)
    b = jnp.zeros((1,), dtype=jnp.float32)
    return W, b


if __name__ == "__main__":
    n_h = 32   # hidden size
    N = 8      # number of nodes (batch)

    key = jax.random.PRNGKey(0)
    k_w, k_c, k_pl, k_mi, k_s1, k_s2 = jax.random.split(key, 6)

    W, bias = init_discriminator_params(k_w, n_h)
    c = jax.random.normal(k_c, (1, n_h), dtype=jnp.float32)      # summary vector
    h_pl = jax.random.normal(k_pl, (N, n_h), dtype=jnp.float32)  # positive embeddings
    h_mi = jax.random.normal(k_mi, (N, n_h), dtype=jnp.float32)  # corrupted embeddings

    logits = discriminator_forward(c, h_pl, h_mi, W, bias)
    jax.block_until_ready(logits)

    # Pure-JAX reference (bilinear semantics, f32).
    c_x = jnp.broadcast_to(c, (N, n_h))
    wc = c_x @ W.T
    ref = jnp.concatenate(
        [jnp.sum(h_pl * wc, axis=-1, keepdims=True) + bias[0],
         jnp.sum(h_mi * wc, axis=-1, keepdims=True) + bias[0]], axis=1)
    assert logits.shape == (N, 2)
    assert jnp.allclose(logits, ref, atol=1e-4, rtol=1e-4)

    # Fused optional s_bias path.
    s1 = jax.random.normal(k_s1, (N, 1), dtype=jnp.float32)
    s2 = jax.random.normal(k_s2, (N, 1), dtype=jnp.float32)
    logits_b = discriminator_forward(c, h_pl, h_mi, W, bias, s_bias1=s1, s_bias2=s2)
    jax.block_until_ready(logits_b)
    ref_b = ref + jnp.concatenate([s1, s2], axis=1)
    assert jnp.allclose(logits_b, ref_b, atol=1e-4, rtol=1e-4)

    print("KERNEL_OK")
</pallas_src>

<mosaic_0001>
module attributes {stable_mosaic.version = 11 : i64} {
  func.func @_discriminator_kernel(%arg0: i32, %arg1: memref<8x32xf32, #tpu.memory_space<vmem>>, %arg2: memref<8x32xf32, #tpu.memory_space<vmem>>, %arg3: memref<1x32xf32, #tpu.memory_space<vmem>>, %arg4: memref<8x2xf32, #tpu.memory_space<vmem>>, %arg5: memref<8x2xf32, #tpu.memory_space<vmem>>) attributes {dimension_semantics = [#tpu.dimension_semantics<parallel>], iteration_bounds = array<i64: 1>, scalar_prefetch = 0 : i64, scratch_operands = 0 : i64, tpu.core_type = #tpu.core_type<tc>, window_params = [{transform_indices = @transform_0, window_bounds = array<i64: 8, 32>}, {transform_indices = @transform_1, window_bounds = array<i64: 8, 32>}, {pipeline_mode = #tpu.pipeline_mode<synchronous>, transform_indices = @transform_2, window_bounds = array<i64: 1, 32>}, {transform_indices = @transform_3, window_bounds = array<i64: 8, 2>}, {transform_indices = @transform_4, window_bounds = array<i64: 8, 2>}]} {
    %c0 = arith.constant 0 : index
    %c0_0 = arith.constant 0 : index
    %0 = vector.load %arg3[%c0, %c0_0] : memref<1x32xf32, #tpu.memory_space<vmem>>, vector<1x32xf32>
    %c0_1 = arith.constant 0 : index
    %c0_2 = arith.constant 0 : index
    %1 = vector.load %arg1[%c0_1, %c0_2] : memref<8x32xf32, #tpu.memory_space<vmem>>, vector<8x32xf32>
    %c0_3 = arith.constant 0 : index
    %c0_4 = arith.constant 0 : index
    %2 = vector.load %arg2[%c0_3, %c0_4] : memref<8x32xf32, #tpu.memory_space<vmem>>, vector<8x32xf32>
    %3 = vector.broadcast %0 : vector<1x32xf32> to vector<8x32xf32>
    %4 = arith.mulf %1, %3 : vector<8x32xf32>
    %cst = arith.constant dense<0.000000e+00> : vector<8xf32>
    %5 = vector.multi_reduction <add>, %4, %cst [1] : vector<8x32xf32> to vector<8xf32>
    %6 = vector.shape_cast %5 : vector<8xf32> to vector<8x1xf32>
    %7 = vector.broadcast %0 : vector<1x32xf32> to vector<8x32xf32>
    %8 = arith.mulf %2, %7 : vector<8x32xf32>
    %cst_5 = arith.constant dense<0.000000e+00> : vector<8xf32>
    %9 = vector.multi_reduction <add>, %8, %cst_5 [1] : vector<8x32xf32> to vector<8xf32>
    %10 = vector.shape_cast %9 : vector<8xf32> to vector<8x1xf32>
    %11 = tpu.concatenate %6, %10 in 1 : vector<8x1xf32>, vector<8x1xf32> -> vector<8x2xf32>
    %c0_6 = arith.constant 0 : index
    %c0_7 = arith.constant 0 : index
    %12 = vector.load %arg4[%c0_6, %c0_7] : memref<8x2xf32, #tpu.memory_space<vmem>>, vector<8x2xf32>
    %13 = arith.addf %11, %12 : vector<8x2xf32>
    %c0_8 = arith.constant 0 : index
    %c0_9 = arith.constant 0 : index
    %14 = vector.load %arg5[%c0_8, %c0_9] : memref<8x2xf32, #tpu.memory_space<vmem>>, vector<8x2xf32>
    tpu.vector_store %arg5[%c0_8, %c0_9], %13 {strides = array<i32>} : memref<8x2xf32, #tpu.memory_space<vmem>>, vector<8x2xf32>,
    return
  }
  func.func @transform_0(%arg0: i32) -> (i32, i32) {
    %c0_i32 = arith.constant 0 : i32
    %c0_i32_0 = arith.constant 0 : i32
    return %arg0, %c0_i32 : i32, i32
  }
  func.func @transform_1(%arg0: i32) -> (i32, i32) {
    %c0_i32 = arith.constant 0 : i32
    %c0_i32_0 = arith.constant 0 : i32
    return %arg0, %c0_i32 : i32, i32
  }
  func.func @transform_2(%arg0: i32) -> (i32, i32) {
    %c0_i32 = arith.constant 0 : i32
    %c0_i32_0 = arith.constant 0 : i32
    %c0_i32_1 = arith.constant 0 : i32
    return %c0_i32, %c0_i32_0 : i32, i32
  }
  func.func @transform_3(%arg0: i32) -> (i32, i32) {
    %c0_i32 = arith.constant 0 : i32
    %c0_i32_0 = arith.constant 0 : i32
    return %arg0, %c0_i32 : i32, i32
  }
  func.func @transform_4(%arg0: i32) -> (i32, i32) {
    %c0_i32 = arith.constant 0 : i32
    %c0_i32_0 = arith.constant 0 : i32
    return %arg0, %c0_i32 : i32, i32
  }
}

</mosaic_0001>

<llo_original>
// kernel: tpu_custom_call.1
$region0: #{tpu_custom_call.1}
  #allocation0 [shape = 'u32[]', space=smem, size = 0x4, offset = 0x4, fixed_abs, tag = 'smem constant byte address 0x4 - core index']
  #allocation1 [shape = 'u32[144,128]{1,0:T(1,128)}', space=vmem, size = 0x12000, scoped, tag = 'internal scratch']
  %s0 = inlined_call_operand.vmem [shape: f32[8,32], index: 0, kind: input, shape index: {}]
  %s1 = inlined_call_operand.hbm [shape: f32[8,32], index: 1, kind: input, shape index: {}]
  %s2 = inlined_call_operand.vmem [shape: f32[1,32], index: 2, kind: input, shape index: {}]
  %s3 = inlined_call_operand.vmem [shape: f32[8,2], index: 3, kind: input, shape index: {}]
  %s4 = inlined_call_operand.vmem [shape: f32[8,2], index: 4, kind: output, shape index: {}]
  %s5 = sld [smem:[#allocation0]]
  $region30: #{tpu_custom_call.1} parent=0
    _
  %s7 = ssub.s32 1, %s5
  %s8 = scalar_select 0, %s7, %s5
  $region1: #{tpu_custom_call.1} parent=0
    #allocation2 [shape = 'u8[4096]{0}', space=vmem, size = 0x1000, scoped, tag = 'input window, operand 1, single buffered']
    #allocation3 [shape = 's32[1]{0}', space=sflag, size = 0x4, scoped, tag = 'scoped memory for tpu_custom_call.1']
    %9 = vsyncpa [#allocation3], 0
    // Predicated region
    $region2: #{tpu_custom_call.1} parent=1 // pred_check
      _
    $region3: #{tpu_custom_call.1} parent=1 // pred_check_branch
      %11 = sbr.rel (0) target = $region5
    $region4: #{tpu_custom_call.1} parent=1 // pred_region
      _
    $region5: #{tpu_custom_call.1} parent=1 // pred_fallthru
      _
    // Predicated region
    $region6: #{tpu_custom_call.1} parent=1 // pred_check
      _
    $region7: #{tpu_custom_call.1} parent=1 // pred_check_branch
      %13 = sbr.rel (0) target = $region9
    $region8: #{tpu_custom_call.1} parent=1 // pred_region
      %s15 = ssub.s32 128, 128
      %16 = vsyncadd [#allocation3], %s15
      %s18 = sshll.u32 [#allocation2], 4
      %s19 = int_to_ptr.vmem [resolvable:$true] %s18
      %21 = dma.hbm_to_vmem [thread:$0]  %s1, 128, %s19, [#allocation3]
    $region9: #{tpu_custom_call.1} parent=1 // pred_fallthru
      _
    // Predicated region
    $region10: #{tpu_custom_call.1} parent=1 // pred_check
      _
    $region11: #{tpu_custom_call.1} parent=1 // pred_check_branch
      %23 = sbr.rel (0) target = $region13
    $region12: #{tpu_custom_call.1} parent=1 // pred_region
      _
    $region13: #{tpu_custom_call.1} parent=1 // pred_fallthru
      _
    // Predicated region
    $region14: #{tpu_custom_call.1} parent=1 // pred_check
      _
    $region15: #{tpu_custom_call.1} parent=1 // pred_check_branch
      %25 = sbr.rel (0) target = $region17
    $region16: #{tpu_custom_call.1} parent=1 // pred_region
      _
    $region17: #{tpu_custom_call.1} parent=1 // pred_fallthru
      _
    // Predicated region
    $region18: #{tpu_custom_call.1} parent=1 // pred_check
      _
    $region19: #{tpu_custom_call.1} parent=1 // pred_check_branch
      %27 = sbr.rel (0) target = $region21
    $region20: #{tpu_custom_call.1} parent=1 // pred_region
      %28 = dma.done [#allocation3], 128
    $region21: #{tpu_custom_call.1} parent=1 // pred_fallthru
      _
    %v29 = vld [vmem:[%s2] sm:$0x1]
    %v30 = vld [vmem:[%s0] sm:$0xff]
    %v31 = vld [vmem:[#allocation2] sm:$0xff]
    %v33 = vlaneseq
    %v34 = vshrl.u32 %v33, 7
    %v35 = vsub.s32 0, %v34
    %v36 = vrot.slane %v29, %v35
    %v38 = vmul.f32 %v30, %v36
    %vm39 = vcmask 261120
    %v40 = vsel %vm39, %v38, 0.0
    %41 = vadd.xlane.f32.xlu0 %v40
    %v42 = vpop.xlane.xlu0 %41
    %v43 = vmul.f32 %v31, %v36
    %v44 = vsel %vm39, %v43, 0.0
    %45 = vadd.xlane.f32.xlu0 %v44
    %v46 = vpop.xlane.xlu0 %45
    %vm47 = vcmask 7168
    %v48 = vsel %vm47, %v42, %v46
    %v49 = vld [vmem:[%s3] sm:$0xff]
    %v50 = vadd.f32 %v48, %v49
    %vm51 = vcmask 15360
    %52 = vst.msk [vmem:[%s4] sm:$0xff] %vm51, %v50
    // Predicated region
    $region22: #{tpu_custom_call.1} parent=1 // pred_check
      _
    $region23: #{tpu_custom_call.1} parent=1 // pred_check_branch
      %54 = sbr.rel (0) target = $region25
    $region24: #{tpu_custom_call.1} parent=1 // pred_region
      _
    $region25: #{tpu_custom_call.1} parent=1 // pred_fallthru
      _
    // Predicated region
    $region26: #{tpu_custom_call.1} parent=1 // pred_check
      _
    $region27: #{tpu_custom_call.1} parent=1 // pred_check_branch
      %56 = sbr.rel (0) target = $region29
    $region28: #{tpu_custom_call.1} parent=1 // pred_region
      _
    $region29: #{tpu_custom_call.1} parent=1 // pred_fallthru
      _
    %57 = vsyncpa [#allocation3], 1

</llo_original>
